<compile_context>
chip_gen: v6e
topology: v6e:2x2x1
jax: 0.10.0
libtpu: 0.0.40
codegen_flags: <defaults>
</compile_context>

<pallas_src>
import functools

import jax
import jax.numpy as jnp
from jax.experimental import pallas as pl
from jax.experimental.pallas import tpu as pltpu

_LANE = 128
_SUBLANE = 8


def _round_up(x: int, m: int) -> int:
    return (x + m - 1) // m * m


def _vmem_capacity_bytes() -> int:
    # Generation-aware VMEM capacity (128 MiB on v5e/v6e, 64 MiB per TC on v7x).
    try:
        return int(pltpu.get_tpu_info().vmem_capacity_bytes)
    except Exception:  # conservative fallback (v7x per-core VMEM)
        return 64 * 1024 * 1024


# ---------------------------------------------------------------------------
# kernels
# ---------------------------------------------------------------------------
def _copy_kernel(x_ref, o_ref):
    # Truncate, lane-aligned path: the DMA'd prefix is exactly the output tile.
    o_ref[...] = x_ref[...]


def _truncate_kernel(x_ref, o_ref, *, fixed_length):
    # Truncate, general path: only round_up(fixed_length, 128) columns were
    # DMA'd in (or the whole row if shorter); keep the first fixed_length.
    o_ref[...] = x_ref[:, :fixed_length]


def _pad_left_kernel(x_ref, o_ref, *, pad_len):
    # Left zero-pad along time with two direct stores (no concatenate temp):
    #   out[:, :pad_len] = 0 ; out[:, pad_len:] = x
    # When pad_len % 128 == 0 both stores are lane-aligned, unmasked vst.
    o_ref[:, :pad_len] = jnp.zeros((o_ref.shape[0], pad_len), dtype=o_ref.dtype)
    o_ref[:, pad_len:] = x_ref[...]


# ---------------------------------------------------------------------------
# tiling helpers
# ---------------------------------------------------------------------------
def _pick_row_tile(batch, in_cols, out_cols, itemsize, vmem_cap):
    """Largest multiple-of-8 row tile whose double-buffered (in + out) blocks
    stay within ~1/4 of physical VMEM (=> 4-8 MiB/buffer on v5e/v6e, 2-4 MiB
    on v7x), capped so the grid has >= 2 steps when the batch allows it
    (keeps both v7x TensorCores busy; ~0.35 us extra step elsewhere)."""
    per_row = 2 * (in_cols + out_cols) * itemsize          # double-buffered in+out
    budget = max(vmem_cap // 4, per_row * _SUBLANE)
    tm = max(_SUBLANE, budget // per_row // _SUBLANE * _SUBLANE)
    if batch >= 2 * _SUBLANE:
        tm = min(tm, _round_up(pl.cdiv(batch, 2), _SUBLANE))
    if batch <= tm:
        return batch                      # full-dim row block is always legal
    return tm


# ---------------------------------------------------------------------------
# forward pass
# ---------------------------------------------------------------------------
def pad_or_truncate(x: jax.Array, fixed_length: int) -> jax.Array:
    """Pallas forward pass of PadOrTruncateLayer.

    x: (batch, length). Returns (batch, fixed_length): truncated to the first
    `fixed_length` samples if too long, left-padded with zeros if too short.
    The length comparison is static (shape-level), mirroring the PyTorch branch.
    """
    if x.ndim != 2:
        raise ValueError(f"expected (batch, length), got {x.shape}")
    batch, length = x.shape
    if length == fixed_length:
        return x

    itemsize = jnp.dtype(x.dtype).itemsize
    vmem_cap = _vmem_capacity_bytes()
    out_shape = jax.ShapeDtypeStruct((batch, fixed_length), x.dtype)

    if length > fixed_length:
        # ---------------- truncate ----------------
        # Only DMA the kept prefix, rounded up to a lane multiple (legal block
        # width); if the row is shorter than that, take the full row.
        in_cols = min(length, _round_up(fixed_length, _LANE))
        if in_cols == fixed_length:
            kernel = _copy_kernel                     # lane-aligned: pure copy
        else:
            kernel = functools.partial(_truncate_kernel, fixed_length=fixed_length)
        bytes_accessed = batch * (in_cols + fixed_length) * itemsize
    else:
        # ---------------- left zero-pad ----------------
        pad_len = fixed_length - length
        in_cols = length
        kernel = functools.partial(_pad_left_kernel, pad_len=pad_len)
        bytes_accessed = batch * (length + fixed_length) * itemsize
        # TODO(synk): for extremely large fixed_length on v7x (64 MiB VMEM),
        # add a second grid axis over 128-multiple column chunks to bound the
        # (tm, fixed_length) block width; not needed at audio-clip scales.

    tm = _pick_row_tile(batch, in_cols, fixed_length, itemsize, vmem_cap)
    grid = (pl.cdiv(batch, tm),)
    in_specs = [pl.BlockSpec((tm, in_cols), lambda i: (i, 0))]
    out_specs = pl.BlockSpec((tm, fixed_length), lambda i: (i, 0))

    # Scoped VMEM limit from the actual double-buffered footprint plus slack.
    per_step_bytes = 2 * (in_cols + fixed_length) * tm * itemsize
    vmem_limit = int(min(vmem_cap, max(per_step_bytes + (8 << 20), 16 << 20)))

    return pl.pallas_call(
        kernel,
        out_shape=out_shape,
        grid_spec=pltpu.PrefetchScalarGridSpec(
            num_scalar_prefetch=0,
            grid=grid,
            in_specs=in_specs,
            out_specs=out_specs,
        ),
        compiler_params=pltpu.CompilerParams(
            dimension_semantics=("parallel",),     # row blocks are independent
            vmem_limit_bytes=vmem_limit,
        ),
        cost_estimate=pl.CostEstimate(
            flops=0, transcendentals=0, bytes_accessed=bytes_accessed),
    )(x)


def _reference(x, fixed_length):
    length = x.shape[1]
    if length > fixed_length:
        return x[:, :fixed_length]
    if length < fixed_length:
        return jnp.pad(x, ((0, 0), (fixed_length - length, 0)))
    return x


if __name__ == "__main__":
    key = jax.random.PRNGKey(0)
    k1, k2, k3, k4, k5, k6 = jax.random.split(key, 6)
    fixed_length = 256

    # truncate branch (lane-aligned fixed_length): length 384 > 256
    x_long = jax.random.normal(k1, (4, 384), dtype=jnp.float32)
    # pad branch, unaligned pad_len=96: length 160 < 256
    x_short = jax.random.normal(k2, (4, 160), dtype=jnp.float32)
    # identity branch: length == 256
    x_exact = jax.random.normal(k3, (4, 256), dtype=jnp.float32)
    # pad branch, lane-aligned pad_len=128: length 128 < 256
    x_pad_aligned = jax.random.normal(k4, (4, 128), dtype=jnp.float32)
    # non-multiple-of-8 batch (edge-masked row block)
    x_odd_batch = jax.random.normal(k5, (5, 384), dtype=jnp.float32)
    # multi-step grid with partial last row block (batch=20 -> tiles of 16)
    x_multi = jax.random.normal(k6, (20, 384), dtype=jnp.float32)

    y_long = pad_or_truncate(x_long, fixed_length)
    y_short = pad_or_truncate(x_short, fixed_length)
    y_exact = pad_or_truncate(x_exact, fixed_length)
    y_pad_aligned = pad_or_truncate(x_pad_aligned, fixed_length)
    y_odd_batch = pad_or_truncate(x_odd_batch, fixed_length)
    y_multi = pad_or_truncate(x_multi, fixed_length)
    # non-lane-aligned truncate path (fixed_length = 200, prefix DMA of 256)
    y_odd_len = pad_or_truncate(x_long, 200)
    jax.block_until_ready(
        (y_long, y_short, y_exact, y_pad_aligned, y_odd_batch, y_multi, y_odd_len))

    assert y_long.shape == (4, fixed_length)
    assert y_short.shape == (4, fixed_length)
    assert y_exact.shape == (4, fixed_length)
    assert y_pad_aligned.shape == (4, fixed_length)
    assert y_odd_batch.shape == (5, fixed_length)
    assert y_multi.shape == (20, fixed_length)
    assert y_odd_len.shape == (4, 200)

    assert bool(jnp.array_equal(y_long, _reference(x_long, fixed_length)))
    assert bool(jnp.array_equal(y_short, _reference(x_short, fixed_length)))
    assert bool(jnp.array_equal(y_exact, _reference(x_exact, fixed_length)))
    assert bool(jnp.array_equal(y_pad_aligned, _reference(x_pad_aligned, fixed_length)))
    assert bool(jnp.array_equal(y_odd_batch, _reference(x_odd_batch, fixed_length)))
    assert bool(jnp.array_equal(y_multi, _reference(x_multi, fixed_length)))
    assert bool(jnp.array_equal(y_odd_len, _reference(x_long, 200)))

    print("KERNEL_OK")
</pallas_src>

<mosaic_0001>
module attributes {stable_mosaic.version = 11 : i64} {
  func.func @_copy_kernel(%arg0: i32, %arg1: memref<4x256xf32, #tpu.memory_space<vmem>>, %arg2: memref<4x256xf32, #tpu.memory_space<vmem>>) attributes {dimension_semantics = [#tpu.dimension_semantics<parallel>], iteration_bounds = array<i64: 1>, scalar_prefetch = 0 : i64, scratch_operands = 0 : i64, tpu.core_type = #tpu.core_type<tc>, window_params = [{transform_indices = @transform_0, window_bounds = array<i64: 4, 256>}, {transform_indices = @transform_1, window_bounds = array<i64: 4, 256>}]} {
    %c0 = arith.constant 0 : index
    %c0_0 = arith.constant 0 : index
    %0 = vector.load %arg1[%c0, %c0_0] : memref<4x256xf32, #tpu.memory_space<vmem>>, vector<4x256xf32>
    %c0_1 = arith.constant 0 : index
    %c0_2 = arith.constant 0 : index
    %1 = vector.load %arg2[%c0_1, %c0_2] : memref<4x256xf32, #tpu.memory_space<vmem>>, vector<4x256xf32>
    tpu.vector_store %arg2[%c0_1, %c0_2], %0 {strides = array<i32>} : memref<4x256xf32, #tpu.memory_space<vmem>>, vector<4x256xf32>,
    return
  }
  func.func @transform_0(%arg0: i32) -> (i32, i32) {
    %c0_i32 = arith.constant 0 : i32
    %c0_i32_0 = arith.constant 0 : i32
    return %arg0, %c0_i32 : i32, i32
  }
  func.func @transform_1(%arg0: i32) -> (i32, i32) {
    %c0_i32 = arith.constant 0 : i32
    %c0_i32_0 = arith.constant 0 : i32
    return %arg0, %c0_i32 : i32, i32
  }
}

</mosaic_0001>

<llo_original>
// kernel: tpu_custom_call.1
$region0: #{tpu_custom_call.1}
  #allocation0 [shape = 'u32[]', space=smem, size = 0x4, offset = 0x4, fixed_abs, tag = 'smem constant byte address 0x4 - core index']
  #allocation1 [shape = 'u32[144,128]{1,0:T(1,128)}', space=vmem, size = 0x12000, scoped, tag = 'internal scratch']
  %s0 = inlined_call_operand.hbm [shape: f32[4,384], index: 0, kind: input, shape index: {}]
  %s1 = inlined_call_operand.hbm [shape: f32[4,256], index: 1, kind: output, shape index: {}]
  %s2 = sld [smem:[#allocation0]]
  $region18: #{tpu_custom_call.1} parent=0
    _
  %s4 = ssub.s32 1, %s2
  %s5 = scalar_select 0, %s4, %s2
  $region1: #{tpu_custom_call.1} parent=0
    #allocation2 [shape = 'u8[4096]{0}', space=vmem, size = 0x1000, scoped, tag = 'input window, operand 0, single buffered']
    #allocation3 [shape = 's32[1]{0}', space=sflag, size = 0x4, scoped, tag = 'scoped memory for tpu_custom_call.1']
    #allocation4 [shape = 's32[1]{0}', space=sflag, size = 0x4, scoped, tag = 'scoped memory for tpu_custom_call.1']
    #allocation5 [shape = 'u8[4096]{0}', space=vmem, size = 0x1000, scoped, tag = 'output window, operand 0, single buffered']
    %6 = vsyncpa [#allocation3], 0
    %7 = vsyncpa [#allocation4], 0
    // Predicated region
    $region2: #{tpu_custom_call.1} parent=1 // pred_check
      _
    $region3: #{tpu_custom_call.1} parent=1 // pred_check_branch
      %9 = sbr.rel (0) target = $region5
    $region4: #{tpu_custom_call.1} parent=1 // pred_region
      %s11 = ssub.s32 128, 128
      %12 = vsyncadd [#allocation3], %s11
      %s14 = sshll.u32 [#allocation2], 4
      %s15 = int_to_ptr.vmem [resolvable:$true] %s14
      %17 = dma.hbm_to_vmem [thread:$0]  %s0, 128, %s15, [#allocation3]
    $region5: #{tpu_custom_call.1} parent=1 // pred_fallthru
      _
    // Predicated region
    $region6: #{tpu_custom_call.1} parent=1 // pred_check
      _
    $region7: #{tpu_custom_call.1} parent=1 // pred_check_branch
      %19 = sbr.rel (0) target = $region9
    $region8: #{tpu_custom_call.1} parent=1 // pred_region
      %20 = dma.done [#allocation3], 128
    $region9: #{tpu_custom_call.1} parent=1 // pred_fallthru
      _
    %v21 = vld [vmem:[#allocation2] sm:$0xff]
    %22 = vst [vmem:[#allocation5] sm:$0xff] %v21
    // Predicated region
    $region10: #{tpu_custom_call.1} parent=1 // pred_check
      _
    $region11: #{tpu_custom_call.1} parent=1 // pred_check_branch
      %24 = sbr.rel (0) target = $region13
    $region12: #{tpu_custom_call.1} parent=1 // pred_region
      %s26 = ssub.s32 128, 128
      %27 = vsyncadd [#allocation4], %s26
      %s29 = sshll.u32 [#allocation5], 4
      %s30 = int_to_ptr.vmem [resolvable:$true] %s29
      %32 = dma.vmem_to_hbm [thread:$0]  %s30, 128, %s1, [#allocation4]
    $region13: #{tpu_custom_call.1} parent=1 // pred_fallthru
      _
    // Predicated region
    $region14: #{tpu_custom_call.1} parent=1 // pred_check
      _
    $region15: #{tpu_custom_call.1} parent=1 // pred_check_branch
      %34 = sbr.rel (0) target = $region17
    $region16: #{tpu_custom_call.1} parent=1 // pred_region
      %35 = dma.done [#allocation4], 128
    $region17: #{tpu_custom_call.1} parent=1 // pred_fallthru
      _
    %36 = vsyncpa [#allocation3], 1
    %37 = vsyncpa [#allocation4], 1

</llo_original>
